<compile_context>
chip_gen: v7x
topology: tpu7x:2x2x1
jax: 0.10.0
libtpu: 0.0.40
codegen_flags: <defaults>
</compile_context>

<pallas_src>
import jax
import jax.numpy as jnp
from jax.experimental import pallas as pl
from jax.experimental.pallas import tpu as pltpu


def _round_up(x: int, m: int) -> int:
    return ((x + m - 1) // m) * m


def _sublane_multiple(dtype) -> int:
    # f32 packs 8 rows per vreg, bf16/f16 pack 16, 1-byte types pack 32.
    itemsize = jnp.dtype(dtype).itemsize
    return max(8, 32 // max(itemsize, 1))


def _chip_config():
    """Returns (target_block_bytes, vmem_limit_bytes, n_tensorcores, bf16_native)."""
    # Safe defaults if detection fails (also fine on v7x's 64 MiB VMEM).
    target, vmem_limit, n_cores, bf16_native = 4 << 20, 40 << 20, 1, False
    kind = ""
    try:
        kind = (jax.devices()[0].device_kind or "").lower()
    except Exception:
        pass
    if "v7" in kind:
        # 64 MiB VMEM per TC, 2 TCs/chip: cap blocks, keep double-buffer headroom.
        target, vmem_limit, n_cores, bf16_native = 4 << 20, 40 << 20, 2, True
    elif "v6" in kind:
        # 128 MiB VMEM, 1 TC: bigger blocks amortize per-step overhead.
        target, vmem_limit, n_cores, bf16_native = 8 << 20, 64 << 20, 1, True
    elif "v5" in kind:
        # 128 MiB VMEM, 1 TC, no bf16 VPU/EUP -> keep f32 math.
        target, vmem_limit, n_cores, bf16_native = 8 << 20, 64 << 20, 1, False
    return target, vmem_limit, n_cores, bf16_native


def _even_grid_rows(rows: int, tr: int, sub: int) -> int:
    """Shrink the row tile so cdiv(rows, tr) is even (balanced 2-TC work)."""
    n_steps = pl.cdiv(rows, tr)
    if n_steps % 2 == 0:
        return tr
    tr_new = max(sub, _round_up(pl.cdiv(rows, n_steps + 1), sub))
    if pl.cdiv(rows, tr_new) % 2 == 0:
        return tr_new
    # Fallback: exactly-2-step split (always even for rows > sub).
    return max(sub, _round_up(pl.cdiv(rows, 2), sub))


def _make_kernel(compute_dtype):
    def kernel(a_ref, x_ref, o_ref):
        # a_ref: SMEM f32 scalar (shape (1,)); x_ref/o_ref: VMEM tiles.
        a = a_ref[0].astype(compute_dtype)
        x = x_ref[...].astype(compute_dtype)
        o_ref[...] = jnp.tanh(a * x).astype(o_ref.dtype)
    return kernel


def adaptive_tanh(x: jax.Array, a: jax.Array, *, donate_x: bool = False) -> jax.Array:
    """tanh(a * x), elementwise. x: any floating shape, a: scalar parameter."""
    if not jnp.issubdtype(x.dtype, jnp.floating):
        raise TypeError(f"adaptive_tanh expects a floating dtype, got {x.dtype}")

    orig_shape = x.shape
    dtype = x.dtype
    itemsize = jnp.dtype(dtype).itemsize
    sub = _sublane_multiple(dtype)
    total = int(x.size)
    if total == 0:
        return x

    target_block_bytes, vmem_limit, n_cores, bf16_native = _chip_config()

    # ---- lane width: widest candidate that divides total (no pad needed) ----
    lanes = None
    for cand in (1024, 512, 256, 128):
        if total % cand == 0:
            lanes = cand
            break
    if lanes is None:
        # Rare: pad the flat array up to a whole row (< lanes extra elements).
        lanes = 128
        for cand in (1024, 512, 256, 128):
            if total >= cand * sub:
                lanes = cand
                break

    rows = pl.cdiv(total, lanes)
    padded_total = rows * lanes
    needs_pad = padded_total != total

    x_flat = jnp.ravel(x)
    if needs_pad:
        x_flat = jnp.pad(x_flat, (0, padded_total - total))
    x2d = x_flat.reshape(rows, lanes)

    # ---- row tile: chip-aware target block size, ragged last block is OK ----
    tr = max(sub, (target_block_bytes // (lanes * itemsize)) // sub * sub)
    if tr >= rows:
        tr = rows  # single full-extent block (always layout-legal)

    # Multi-TensorCore chips: even grid step count so both cores get equal work.
    if n_cores >= 2 and rows > sub:
        tr = _even_grid_rows(rows, tr, sub)

    grid = (pl.cdiv(rows, tr),)

    # bf16-native chips keep bf16 math (halves vreg/VPU/EUP work); f32 otherwise.
    compute_dtype = jnp.bfloat16 if (dtype == jnp.bfloat16 and bf16_native) else jnp.float32

    a_f32 = jnp.asarray(a, dtype=jnp.float32).reshape((1,))

    out2d = pl.pallas_call(
        _make_kernel(compute_dtype),
        out_shape=jax.ShapeDtypeStruct((rows, lanes), dtype),
        grid_spec=pltpu.PrefetchScalarGridSpec(
            num_scalar_prefetch=0,
            grid=grid,
            in_specs=[
                pl.BlockSpec(memory_space=pltpu.MemorySpace.SMEM),  # scalar a
                pl.BlockSpec((tr, lanes), lambda i: (i, 0)),        # x tile
            ],
            out_specs=pl.BlockSpec((tr, lanes), lambda i: (i, 0)),
        ),
        compiler_params=pltpu.CompilerParams(
            dimension_semantics=("parallel",),
            vmem_limit_bytes=vmem_limit,
        ),
        input_output_aliases=({1: 0} if donate_x else {}),
    )(a_f32, x2d)

    if needs_pad:
        return out2d.reshape(-1)[:total].reshape(orig_shape)
    return out2d.reshape(orig_shape)


if __name__ == "__main__":
    key = jax.random.PRNGKey(0)
    x = jax.random.normal(key, (2, 4, 16, 16), dtype=jnp.float32)

    # Deterministic parameter init matching nn.Parameter(torch.ones(1) * 10).
    n = 10
    a = jnp.ones((1,), dtype=jnp.float32) * n

    out = adaptive_tanh(x, a)
    jax.block_until_ready(out)

    # Sanity check against plain JAX reference.
    ref = jnp.tanh(a * x)
    assert out.shape == x.shape and out.dtype == x.dtype
    assert jnp.allclose(out, ref, atol=1e-5, rtol=1e-5)

    print("KERNEL_OK")
</pallas_src>

<mosaic_0001>
module attributes {stable_mosaic.version = 11 : i64} {
  func.func @kernel(%arg0: i32, %arg1: memref<1xf32, #tpu.memory_space<smem>>, %arg2: memref<2x1024xf32, #tpu.memory_space<vmem>>, %arg3: memref<2x1024xf32, #tpu.memory_space<vmem>>) attributes {dimension_semantics = [#tpu.dimension_semantics<parallel>], iteration_bounds = array<i64: 1>, scalar_prefetch = 0 : i64, scratch_operands = 0 : i64, tpu.core_type = #tpu.core_type<tc>, window_params = [{transform_indices = @transform_0, window_bounds = array<i64: 1>}, {transform_indices = @transform_1, window_bounds = array<i64: 2, 1024>}, {transform_indices = @transform_2, window_bounds = array<i64: 2, 1024>}]} {
    %c0 = arith.constant 0 : index
    %0 = memref.load %arg1[%c0] : memref<1xf32, #tpu.memory_space<smem>>
    %c0_0 = arith.constant 0 : index
    %c0_1 = arith.constant 0 : index
    %1 = vector.load %arg2[%c0_0, %c0_1] : memref<2x1024xf32, #tpu.memory_space<vmem>>, vector<2x1024xf32>
    %2 = vector.broadcast %0 : f32 to vector<2x1024xf32>
    %3 = arith.mulf %2, %1 : vector<2x1024xf32>
    %4 = math.tanh %3 : vector<2x1024xf32>
    %c0_2 = arith.constant 0 : index
    %c0_3 = arith.constant 0 : index
    %5 = vector.load %arg3[%c0_2, %c0_3] : memref<2x1024xf32, #tpu.memory_space<vmem>>, vector<2x1024xf32>
    tpu.vector_store %arg3[%c0_2, %c0_3], %4 {strides = array<i32>} : memref<2x1024xf32, #tpu.memory_space<vmem>>, vector<2x1024xf32>,
    return
  }
  func.func @transform_0(%arg0: i32) -> i32 {
    %c0_i32 = arith.constant 0 : i32
    %c0_i32_0 = arith.constant 0 : i32
    return %c0_i32 : i32
  }
  func.func @transform_1(%arg0: i32) -> (i32, i32) {
    %c0_i32 = arith.constant 0 : i32
    %c0_i32_0 = arith.constant 0 : i32
    return %arg0, %c0_i32 : i32, i32
  }
  func.func @transform_2(%arg0: i32) -> (i32, i32) {
    %c0_i32 = arith.constant 0 : i32
    %c0_i32_0 = arith.constant 0 : i32
    return %arg0, %c0_i32 : i32, i32
  }
}

</mosaic_0001>

<llo_original>
// kernel: tpu_custom_call.1
$region0: #{tpu_custom_call.1}
  #allocation0 [shape = 'u32[]', space=smem, size = 0x4, offset = 0x4, fixed_abs, tag = 'smem constant byte address 0x4 - core index']
  #allocation1 [shape = 'u32[144,128]{1,0:T(1,128)}', space=vmem, size = 0x12000, scoped, tag = 'internal scratch']
  #allocation2 [shape = 'f32[1]{0:T(128)S(6)}', space=smem, size = 0x200, scoped, tag = 'scoped memory for tpu_custom_call.1']
  %s0 = inlined_call_operand.<no memory space> [shape: f32[1], index: 0, kind: input, shape index: {}]
  %s1 = inlined_call_operand.hbm [shape: f32[2,1024], index: 1, kind: input, shape index: {}]
  %s2 = inlined_call_operand.hbm [shape: f32[2,1024], index: 2, kind: output, shape index: {}]
  %s3 = sld [smem:[#allocation0]]
  $region22: #{tpu_custom_call.1} parent=0
    _
  %s5 = ssub.s32 1, %s3
  %s6 = scalar_select 0, %s5, %s3
  %7 = sst [smem:[#allocation2]] %s0
  $region1: #{tpu_custom_call.1} parent=0
    #allocation3 [shape = 'u8[8192]{0}', space=vmem, size = 0x2000, scoped, tag = 'input window, operand 1, single buffered']
    #allocation4 [shape = 's32[1]{0}', space=sflag, size = 0x4, scoped, tag = 'scoped memory for tpu_custom_call.1']
    #allocation5 [shape = 's32[1]{0}', space=sflag, size = 0x4, scoped, tag = 'scoped memory for tpu_custom_call.1']
    #allocation6 [shape = 'u8[8192]{0}', space=vmem, size = 0x2000, scoped, tag = 'output window, operand 0, single buffered']
    %8 = vsyncpa [#allocation4], 0
    %9 = vsyncpa [#allocation5], 0
    // Predicated region
    $region2: #{tpu_custom_call.1} parent=1 // pred_check
      _
    $region3: #{tpu_custom_call.1} parent=1 // pred_check_branch
      %11 = sbr.rel (0) target = $region5
    $region4: #{tpu_custom_call.1} parent=1 // pred_region
      _
    $region5: #{tpu_custom_call.1} parent=1 // pred_fallthru
      _
    // Predicated region
    $region6: #{tpu_custom_call.1} parent=1 // pred_check
      _
    $region7: #{tpu_custom_call.1} parent=1 // pred_check_branch
      %13 = sbr.rel (0) target = $region9
    $region8: #{tpu_custom_call.1} parent=1 // pred_region
      %s15 = ssub.s32 256, 256
      %16 = vsyncadd [#allocation4], %s15
      %s18 = sshll.u32 [#allocation3], 4
      %s19 = int_to_ptr.vmem [resolvable:$true] %s18
      %21 = dma.hbm_to_vmem [thread:$0]  %s1, 256, %s19, [#allocation4]
    $region9: #{tpu_custom_call.1} parent=1 // pred_fallthru
      _
    // Predicated region
    $region10: #{tpu_custom_call.1} parent=1 // pred_check
      _
    $region11: #{tpu_custom_call.1} parent=1 // pred_check_branch
      %23 = sbr.rel (0) target = $region13
    $region12: #{tpu_custom_call.1} parent=1 // pred_region
      %24 = dma.done [#allocation4], 256
    $region13: #{tpu_custom_call.1} parent=1 // pred_fallthru
      _
    %s25 = sld [smem:[#allocation2]]
    %v26 = vld [vmem:[#allocation3] sm:$0xff]
    %v27 = vld [vmem:[#allocation3 + $0x8] sm:$0xff]
    %v28 = vstv %s25
    %v29 = vmul.f32 %v28, %v26
    %v30 = vmul.f32 %v28, %v27
    %v31 = vtanh.pop %v29
    %v32 = vtanh.pop %v30
    %33 = vst [vmem:[#allocation6] sm:$0xff] %v31
    %34 = vst [vmem:[#allocation6 + $0x8] sm:$0xff] %v32
    // Predicated region
    $region14: #{tpu_custom_call.1} parent=1 // pred_check
      _
    $region15: #{tpu_custom_call.1} parent=1 // pred_check_branch
      %36 = sbr.rel (0) target = $region17
    $region16: #{tpu_custom_call.1} parent=1 // pred_region
      %s38 = ssub.s32 256, 256
      %39 = vsyncadd [#allocation5], %s38
      %s41 = sshll.u32 [#allocation6], 4
      %s42 = int_to_ptr.vmem [resolvable:$true] %s41
      %44 = dma.vmem_to_hbm [thread:$0]  %s42, 256, %s2, [#allocation5]
    $region17: #{tpu_custom_call.1} parent=1 // pred_fallthru
      _
    // Predicated region
    $region18: #{tpu_custom_call.1} parent=1 // pred_check
      _
    $region19: #{tpu_custom_call.1} parent=1 // pred_check_branch
      %46 = sbr.rel (0) target = $region21
    $region20: #{tpu_custom_call.1} parent=1 // pred_region
      %47 = dma.done [#allocation5], 256
    $region21: #{tpu_custom_call.1} parent=1 // pred_fallthru
      _
    %48 = vsyncpa [#allocation4], 1
    %49 = vsyncpa [#allocation5], 1

</llo_original>
